<compile_context>
chip_gen: v7x
topology: tpu7x:2x2x1
jax: 0.10.0
libtpu: 0.0.40
codegen_flags: <defaults>
</compile_context>

<pallas_src>
import jax
import jax.numpy as jnp
from jax.experimental import pallas as pl
from jax.experimental.pallas import tpu as pltpu


# --------------------------------------------------------------------------- kernel
def _to_edge_kernel(vs_ref, vd_ref, e1_ref, e2_ref,
                    w1s_ref, w1d_ref, w1e1_ref, w1e2_ref, b1_ref,
                    w2_ref, b2_ref, w3_ref, b3_ref, out_ref):
    f32 = jnp.float32

    # ---- mlp_msg_Gcc1 first Linear: four partial dots == concat(x) @ W1 ----
    h = jnp.dot(vs_ref[...], w1s_ref[...], preferred_element_type=f32)
    h = h + jnp.dot(vd_ref[...], w1d_ref[...], preferred_element_type=f32)
    h = h + jnp.dot(e1_ref[...], w1e1_ref[...], preferred_element_type=f32)
    h = h + jnp.dot(e2_ref[...], w1e2_ref[...], preferred_element_type=f32)
    h = jnp.maximum(h + b1_ref[...], 0.0)                      # [te, 3F]

    # ---- mlp_msg_Gcc1 second Linear, fused columns [f1..f4 | k] ----
    y = jnp.dot(h, w2_ref[...], preferred_element_type=f32) + b2_ref[...]   # [te, 4F+1]
    f4 = w3_ref.shape[0]                                        # 4F
    k = jax.nn.sigmoid(y[:, f4:f4 + 1])                         # [te, 1]
    f = y[:, :f4] * k                                           # gated [te, 4F]

    # ---- mlp_msg_Gcc2 ----
    out = jnp.dot(f, w3_ref[...], preferred_element_type=f32) + b3_ref[...]  # [te, F]

    # Lane-dense (or identity, in the fallback layout) store.
    out_ref[...] = out.reshape(out_ref.shape).astype(out_ref.dtype)


# ------------------------------------------------------------------------- wrapper
def _round_up(a, m):
    return ((a + m - 1) // m) * m


def to_edge_pallas(vc_src, vc_dst, ve1, ve2, kparams, *, te=512):
    """Per-edge MLP. Inputs are [E, d] edge-row arrays; returns [E, n_out_fe]."""
    (w1s, w1d, w1e1, w1e2, b1, w2, b2, w3, b3) = kparams
    E = vc_src.shape[0]
    fout = w3.shape[1]

    # Tile selection: big tiles amortize per-step overhead; keep te a multiple of 8,
    # and a multiple of 64 when the grid has >1 step so the packed output block
    # (te//8 sublanes) stays 8-aligned.  Many steps also let v7x use both TCs.
    te = max(8, min(int(te), _round_up(E, 8)))
    te = _round_up(te, 8)
    if _round_up(E, te) > te:
        te = _round_up(te, 64)
    e_pad = _round_up(E, te)
    n_steps = e_pad // te

    def pad_rows(a):
        return a if a.shape[0] == e_pad else jnp.pad(a, ((0, e_pad - a.shape[0]), (0, 0)))

    vs, vd, e1, e2 = (pad_rows(a) for a in (vc_src, vc_dst, ve1, ve2))

    edge_spec = lambda d: pl.BlockSpec((te, d), lambda i: (i, 0))
    const_spec = lambda a: pl.BlockSpec(a.shape, lambda i: (0, 0))   # never re-DMA'd
    in_specs = [edge_spec(vs.shape[1]), edge_spec(vd.shape[1]),
                edge_spec(e1.shape[1]), edge_spec(e2.shape[1])] + \
               [const_spec(a) for a in (w1s, w1d, w1e1, w1e2, b1, w2, b2, w3, b3)]

    operands = (vs, vd, e1, e2, w1s, w1d, w1e1, w1e2, b1, w2, b2, w3, b3)

    def run(pack):
        if pack:
            # (e_pad//8, 8*fout) has identical row-major bytes to (e_pad, fout),
            # but the kernel store is lane-dense (128 lanes when fout=16).
            out_shape = jax.ShapeDtypeStruct((e_pad // 8, 8 * fout), jnp.float32)
            out_spec = pl.BlockSpec((te // 8, 8 * fout), lambda i: (i, 0))
        else:
            out_shape = jax.ShapeDtypeStruct((e_pad, fout), jnp.float32)
            out_spec = pl.BlockSpec((te, fout), lambda i: (i, 0))
        out = pl.pallas_call(
            _to_edge_kernel,
            out_shape=out_shape,
            grid=(n_steps,),
            in_specs=in_specs,
            out_specs=out_spec,
            compiler_params=pltpu.CompilerParams(
                dimension_semantics=("parallel",)),
        )(*operands)
        return out.reshape(e_pad, fout)[:E]

    try:
        return run(pack=True)
    except Exception:
        # Fallback: the lane-packing needs a sublane->lane shape cast inside the
        # kernel; if this Mosaic toolchain can't lower it, use the plain layout.
        return run(pack=False)


# ------------------------------------------------------------------- param plumbing
def init_params(key, n_in_fc, n_in_fe1, n_in_fe2, n_out_fe):
    """PyTorch-layout synthetic parameters (w2/b2 keep the [k | f1..f4] column order)."""
    din = n_in_fc * 2 + n_in_fe1 + n_in_fe2
    hid = n_out_fe * 3
    y_dim = n_out_fe * 4 + 1
    f4 = n_out_fe * 4
    ks = jax.random.split(key, 3)

    def lin(k, fan_in, fan_out):
        bound = 1.0 / jnp.sqrt(fan_in)
        kw, kb = jax.random.split(k)
        w = jax.random.uniform(kw, (fan_in, fan_out), jnp.float32, -bound, bound)
        b = jax.random.uniform(kb, (fan_out,), jnp.float32, -bound, bound)
        return w, b

    w1, b1 = lin(ks[0], din, hid)        # mlp_msg_Gcc1 first Linear
    w2, b2 = lin(ks[1], hid, y_dim)      # mlp_msg_Gcc1 second Linear ([k | f1..f4])
    w3, b3 = lin(ks[2], f4, n_out_fe)    # mlp_msg_Gcc2
    return (w1, b1, w2, b2, w3, b3)


def prepare_pallas_params(params, n_in_fc, n_in_fe1, n_in_fe2):
    """Re-layout PyTorch params for the kernel: row-split W1, reorder W2 to [f|k]."""
    w1, b1, w2, b2, w3, b3 = params
    w1s = w1[:n_in_fc]
    w1d = w1[n_in_fc:2 * n_in_fc]
    w1e1 = w1[2 * n_in_fc:2 * n_in_fc + n_in_fe1]
    w1e2 = w1[2 * n_in_fc + n_in_fe1:]
    w2fk = jnp.concatenate([w2[:, 1:], w2[:, :1]], axis=1)     # columns [f1..f4 | k]
    b2fk = jnp.concatenate([b2[1:], b2[:1]])[None, :]
    return (w1s, w1d, w1e1, w1e2, b1[None, :], w2fk, b2fk, w3, b3[None, :])


# ---------------------------------------------------------------------------- glue
def to_edge_forward(params, src_idx, dst_idx, in_vc, in_ve1, in_ve2, *, te=512):
    n_in_fc = in_vc.shape[1]
    kparams = prepare_pallas_params(params, n_in_fc, in_ve1.shape[1], in_ve2.shape[1])
    vc_src = in_vc[src_idx]          # graph gather stays in plain JAX (see TODO above)
    vc_dst = in_vc[dst_idx]
    return to_edge_pallas(vc_src, vc_dst, in_ve1, in_ve2, kparams, te=te)


def to_edge_reference(params, src_idx, dst_idx, in_vc, in_ve1, in_ve2):
    """Pure-JAX replica of the PyTorch module (the correctness oracle)."""
    w1, b1, w2, b2, w3, b3 = params
    F = w3.shape[1]
    x = jnp.concatenate([in_vc[src_idx], in_vc[dst_idx], in_ve1, in_ve2], axis=1)
    h = jnp.maximum(x @ w1 + b1, 0.0)
    y = h @ w2 + b2
    k = jax.nn.sigmoid(y[:, :1])
    f1, f2, f3, f4 = (y[:, 1:1 + F], y[:, 1 + F:1 + 2 * F],
                      y[:, 1 + 2 * F:1 + 3 * F], y[:, 1 + 3 * F:1 + 4 * F])
    gated = jnp.concatenate([f1 * k, f2 * k, f3 * k, f4 * k], axis=1)
    return gated @ w3 + b3


# ---------------------------------------------------------------------------- demo
if __name__ == "__main__":
    # small synthetic graph / feature sizes matching the module
    n_in_fc, n_in_fe1, n_in_fe2, n_out_fe = 8, 4, 4, 16
    n_nodes, n_edges = 7, 20

    key = jax.random.PRNGKey(0)
    k_par, k_vc, k_e1, k_e2 = jax.random.split(key, 4)

    params = init_params(k_par, n_in_fc, n_in_fe1, n_in_fe2, n_out_fe)

    in_vc = jax.random.normal(k_vc, (n_nodes, n_in_fc), jnp.float32)
    in_ve1 = jax.random.normal(k_e1, (n_edges, n_in_fe1), jnp.float32)
    in_ve2 = jax.random.normal(k_e2, (n_edges, n_in_fe2), jnp.float32)

    # deterministic synthetic edge list for the ('gc','e_cc','gc') relation
    src_idx = jnp.arange(n_edges, dtype=jnp.int32) % n_nodes
    dst_idx = (jnp.arange(n_edges, dtype=jnp.int32) * 3 + 1) % n_nodes

    out = to_edge_forward(params, src_idx, dst_idx, in_vc, in_ve1, in_ve2)
    out = jax.block_until_ready(out)

    ref = to_edge_reference(params, src_idx, dst_idx, in_vc, in_ve1, in_ve2)
    assert out.shape == (n_edges, n_out_fe)
    assert jnp.allclose(out, ref, atol=1e-4, rtol=1e-4)

    print("KERNEL_OK")
</pallas_src>

<mosaic_0001>
module attributes {stable_mosaic.version = 11 : i64} {
  func.func @_to_edge_kernel(%arg0: i32, %arg1: memref<24x8xf32, #tpu.memory_space<vmem>>, %arg2: memref<24x8xf32, #tpu.memory_space<vmem>>, %arg3: memref<24x4xf32, #tpu.memory_space<vmem>>, %arg4: memref<24x4xf32, #tpu.memory_space<vmem>>, %arg5: memref<8x48xf32, #tpu.memory_space<vmem>>, %arg6: memref<8x48xf32, #tpu.memory_space<vmem>>, %arg7: memref<4x48xf32, #tpu.memory_space<vmem>>, %arg8: memref<4x48xf32, #tpu.memory_space<vmem>>, %arg9: memref<1x48xf32, #tpu.memory_space<vmem>>, %arg10: memref<48x65xf32, #tpu.memory_space<vmem>>, %arg11: memref<1x65xf32, #tpu.memory_space<vmem>>, %arg12: memref<64x16xf32, #tpu.memory_space<vmem>>, %arg13: memref<1x16xf32, #tpu.memory_space<vmem>>, %arg14: memref<3x128xf32, #tpu.memory_space<vmem>>) attributes {dimension_semantics = [#tpu.dimension_semantics<parallel>], iteration_bounds = array<i64: 1>, scalar_prefetch = 0 : i64, scratch_operands = 0 : i64, tpu.core_type = #tpu.core_type<tc>, window_params = [{transform_indices = @transform_0, window_bounds = array<i64: 24, 8>}, {transform_indices = @transform_1, window_bounds = array<i64: 24, 8>}, {transform_indices = @transform_2, window_bounds = array<i64: 24, 4>}, {transform_indices = @transform_3, window_bounds = array<i64: 24, 4>}, {pipeline_mode = #tpu.pipeline_mode<synchronous>, transform_indices = @transform_4, window_bounds = array<i64: 8, 48>}, {pipeline_mode = #tpu.pipeline_mode<synchronous>, transform_indices = @transform_5, window_bounds = array<i64: 8, 48>}, {pipeline_mode = #tpu.pipeline_mode<synchronous>, transform_indices = @transform_6, window_bounds = array<i64: 4, 48>}, {pipeline_mode = #tpu.pipeline_mode<synchronous>, transform_indices = @transform_7, window_bounds = array<i64: 4, 48>}, {pipeline_mode = #tpu.pipeline_mode<synchronous>, transform_indices = @transform_8, window_bounds = array<i64: 1, 48>}, {pipeline_mode = #tpu.pipeline_mode<synchronous>, transform_indices = @transform_9, window_bounds = array<i64: 48, 65>}, {pipeline_mode = #tpu.pipeline_mode<synchronous>, transform_indices = @transform_10, window_bounds = array<i64: 1, 65>}, {pipeline_mode = #tpu.pipeline_mode<synchronous>, transform_indices = @transform_11, window_bounds = array<i64: 64, 16>}, {pipeline_mode = #tpu.pipeline_mode<synchronous>, transform_indices = @transform_12, window_bounds = array<i64: 1, 16>}, {transform_indices = @transform_13, window_bounds = array<i64: 3, 128>}]} {
    %c0 = arith.constant 0 : index
    %c0_0 = arith.constant 0 : index
    %0 = vector.load %arg1[%c0, %c0_0] : memref<24x8xf32, #tpu.memory_space<vmem>>, vector<24x8xf32>
    %c0_1 = arith.constant 0 : index
    %c0_2 = arith.constant 0 : index
    %1 = vector.load %arg5[%c0_1, %c0_2] : memref<8x48xf32, #tpu.memory_space<vmem>>, vector<8x48xf32>
    %cst = arith.constant dense<0.000000e+00> : vector<24x48xf32>
    %2 = tpu.matmul %0, %1, %cst {dimension_numbers = #tpu.dot_dimension_numbers<[1], [0], [0], [1], [0, 0, 1, 1], [], []>} : vector<24x8xf32>, vector<8x48xf32>, vector<24x48xf32> -> vector<24x48xf32>
    %c0_3 = arith.constant 0 : index
    %c0_4 = arith.constant 0 : index
    %3 = vector.load %arg2[%c0_3, %c0_4] : memref<24x8xf32, #tpu.memory_space<vmem>>, vector<24x8xf32>
    %c0_5 = arith.constant 0 : index
    %c0_6 = arith.constant 0 : index
    %4 = vector.load %arg6[%c0_5, %c0_6] : memref<8x48xf32, #tpu.memory_space<vmem>>, vector<8x48xf32>
    %cst_7 = arith.constant dense<0.000000e+00> : vector<24x48xf32>
    %5 = tpu.matmul %3, %4, %cst_7 {dimension_numbers = #tpu.dot_dimension_numbers<[1], [0], [0], [1], [0, 0, 1, 1], [], []>} : vector<24x8xf32>, vector<8x48xf32>, vector<24x48xf32> -> vector<24x48xf32>
    %6 = arith.addf %2, %5 : vector<24x48xf32>
    %c0_8 = arith.constant 0 : index
    %c0_9 = arith.constant 0 : index
    %7 = vector.load %arg3[%c0_8, %c0_9] : memref<24x4xf32, #tpu.memory_space<vmem>>, vector<24x4xf32>
    %c0_10 = arith.constant 0 : index
    %c0_11 = arith.constant 0 : index
    %8 = vector.load %arg7[%c0_10, %c0_11] : memref<4x48xf32, #tpu.memory_space<vmem>>, vector<4x48xf32>
    %cst_12 = arith.constant dense<0.000000e+00> : vector<24x48xf32>
    %9 = tpu.matmul %7, %8, %cst_12 {dimension_numbers = #tpu.dot_dimension_numbers<[1], [0], [0], [1], [0, 0, 1, 1], [], []>} : vector<24x4xf32>, vector<4x48xf32>, vector<24x48xf32> -> vector<24x48xf32>
    %10 = arith.addf %6, %9 : vector<24x48xf32>
    %c0_13 = arith.constant 0 : index
    %c0_14 = arith.constant 0 : index
    %11 = vector.load %arg4[%c0_13, %c0_14] : memref<24x4xf32, #tpu.memory_space<vmem>>, vector<24x4xf32>
    %c0_15 = arith.constant 0 : index
    %c0_16 = arith.constant 0 : index
    %12 = vector.load %arg8[%c0_15, %c0_16] : memref<4x48xf32, #tpu.memory_space<vmem>>, vector<4x48xf32>
    %cst_17 = arith.constant dense<0.000000e+00> : vector<24x48xf32>
    %13 = tpu.matmul %11, %12, %cst_17 {dimension_numbers = #tpu.dot_dimension_numbers<[1], [0], [0], [1], [0, 0, 1, 1], [], []>} : vector<24x4xf32>, vector<4x48xf32>, vector<24x48xf32> -> vector<24x48xf32>
    %14 = arith.addf %10, %13 : vector<24x48xf32>
    %c0_18 = arith.constant 0 : index
    %c0_19 = arith.constant 0 : index
    %15 = vector.load %arg9[%c0_18, %c0_19] : memref<1x48xf32, #tpu.memory_space<vmem>>, vector<1x48xf32>
    %16 = vector.broadcast %15 : vector<1x48xf32> to vector<24x48xf32>
    %17 = arith.addf %14, %16 : vector<24x48xf32>
    %cst_20 = arith.constant 0.000000e+00 : f32
    %18 = vector.broadcast %cst_20 : f32 to vector<24x48xf32>
    %19 = arith.maximumf %17, %18 : vector<24x48xf32>
    %c0_21 = arith.constant 0 : index
    %c0_22 = arith.constant 0 : index
    %20 = vector.load %arg10[%c0_21, %c0_22] : memref<48x65xf32, #tpu.memory_space<vmem>>, vector<48x65xf32>
    %cst_23 = arith.constant dense<0.000000e+00> : vector<24x65xf32>
    %21 = tpu.matmul %19, %20, %cst_23 {dimension_numbers = #tpu.dot_dimension_numbers<[1], [0], [0], [1], [0, 0, 1, 1], [], []>} : vector<24x48xf32>, vector<48x65xf32>, vector<24x65xf32> -> vector<24x65xf32>
    %c0_24 = arith.constant 0 : index
    %c0_25 = arith.constant 0 : index
    %22 = vector.load %arg11[%c0_24, %c0_25] : memref<1x65xf32, #tpu.memory_space<vmem>>, vector<1x65xf32>
    %23 = vector.broadcast %22 : vector<1x65xf32> to vector<24x65xf32>
    %24 = arith.addf %21, %23 : vector<24x65xf32>
    %25 = vector.extract_strided_slice %24 {offsets = [0, 64], sizes = [24, 1], strides = [1, 1]} : vector<24x65xf32> to vector<24x1xf32>
    %26 = arith.negf %25 : vector<24x1xf32>
    %27 = math.exp %26 : vector<24x1xf32>
    %cst_26 = arith.constant 1.000000e+00 : f32
    %28 = vector.broadcast %cst_26 : f32 to vector<24x1xf32>
    %29 = arith.addf %28, %27 : vector<24x1xf32>
    %30 = arith.divf %28, %29 : vector<24x1xf32>
    %31 = vector.extract_strided_slice %24 {offsets = [0, 0], sizes = [24, 64], strides = [1, 1]} : vector<24x65xf32> to vector<24x64xf32>
    %32 = vector.broadcast %30 : vector<24x1xf32> to vector<24x64xf32>
    %33 = arith.mulf %31, %32 : vector<24x64xf32>
    %c0_27 = arith.constant 0 : index
    %c0_28 = arith.constant 0 : index
    %34 = vector.load %arg12[%c0_27, %c0_28] : memref<64x16xf32, #tpu.memory_space<vmem>>, vector<64x16xf32>
    %cst_29 = arith.constant dense<0.000000e+00> : vector<24x16xf32>
    %35 = tpu.matmul %33, %34, %cst_29 {dimension_numbers = #tpu.dot_dimension_numbers<[1], [0], [0], [1], [0, 0, 1, 1], [], []>} : vector<24x64xf32>, vector<64x16xf32>, vector<24x16xf32> -> vector<24x16xf32>
    %c0_30 = arith.constant 0 : index
    %c0_31 = arith.constant 0 : index
    %36 = vector.load %arg13[%c0_30, %c0_31] : memref<1x16xf32, #tpu.memory_space<vmem>>, vector<1x16xf32>
    %37 = vector.broadcast %36 : vector<1x16xf32> to vector<24x16xf32>
    %38 = arith.addf %35, %37 : vector<24x16xf32>
    %39 = vector.shape_cast %38 : vector<24x16xf32> to vector<3x128xf32>
    %c0_32 = arith.constant 0 : index
    %c0_33 = arith.constant 0 : index
    %40 = vector.load %arg14[%c0_32, %c0_33] : memref<3x128xf32, #tpu.memory_space<vmem>>, vector<3x128xf32>
    tpu.vector_store %arg14[%c0_32, %c0_33], %39 {strides = array<i32>} : memref<3x128xf32, #tpu.memory_space<vmem>>, vector<3x128xf32>,
    return
  }
  func.func @transform_0(%arg0: i32) -> (i32, i32) {
    %c0_i32 = arith.constant 0 : i32
    %c0_i32_0 = arith.constant 0 : i32
    return %arg0, %c0_i32 : i32, i32
  }
  func.func @transform_1(%arg0: i32) -> (i32, i32) {
    %c0_i32 = arith.constant 0 : i32
    %c0_i32_0 = arith.constant 0 : i32
    return %arg0, %c0_i32 : i32, i32
  }
  func.func @transform_2(%arg0: i32) -> (i32, i32) {
    %c0_i32 = arith.constant 0 : i32
    %c0_i32_0 = arith.constant 0 : i32
    return %arg0, %c0_i32 : i32, i32
  }
  func.func @transform_3(%arg0: i32) -> (i32, i32) {
    %c0_i32 = arith.constant 0 : i32
    %c0_i32_0 = arith.constant 0 : i32
    return %arg0, %c0_i32 : i32, i32
  }
  func.func @transform_4(%arg0: i32) -> (i32, i32) {
    %c0_i32 = arith.constant 0 : i32
    %c0_i32_0 = arith.constant 0 : i32
    %c0_i32_1 = arith.constant 0 : i32
    return %c0_i32, %c0_i32_0 : i32, i32
  }
  func.func @transform_5(%arg0: i32) -> (i32, i32) {
    %c0_i32 = arith.constant 0 : i32
    %c0_i32_0 = arith.constant 0 : i32
    %c0_i32_1 = arith.constant 0 : i32
    return %c0_i32, %c0_i32_0 : i32, i32
  }
  func.func @transform_6(%arg0: i32) -> (i32, i32) {
    %c0_i32 = arith.constant 0 : i32
    %c0_i32_0 = arith.constant 0 : i32
    %c0_i32_1 = arith.constant 0 : i32
    return %c0_i32, %c0_i32_0 : i32, i32
  }
  func.func @transform_7(%arg0: i32) -> (i32, i32) {
    %c0_i32 = arith.constant 0 : i32
    %c0_i32_0 = arith.constant 0 : i32
    %c0_i32_1 = arith.constant 0 : i32
    return %c0_i32, %c0_i32_0 : i32, i32
  }
  func.func @transform_8(%arg0: i32) -> (i32, i32) {
    %c0_i32 = arith.constant 0 : i32
    %c0_i32_0 = arith.constant 0 : i32
    %c0_i32_1 = arith.constant 0 : i32
    return %c0_i32, %c0_i32_0 : i32, i32
  }
  func.func @transform_9(%arg0: i32) -> (i32, i32) {
    %c0_i32 = arith.constant 0 : i32
    %c0_i32_0 = arith.constant 0 : i32
    %c0_i32_1 = arith.constant 0 : i32
    return %c0_i32, %c0_i32_0 : i32, i32
  }
  func.func @transform_10(%arg0: i32) -> (i32, i32) {
    %c0_i32 = arith.constant 0 : i32
    %c0_i32_0 = arith.constant 0 : i32
    %c0_i32_1 = arith.constant 0 : i32
    return %c0_i32, %c0_i32_0 : i32, i32
  }
  func.func @transform_11(%arg0: i32) -> (i32, i32) {
    %c0_i32 = arith.constant 0 : i32
    %c0_i32_0 = arith.constant 0 : i32
    %c0_i32_1 = arith.constant 0 : i32
    return %c0_i32, %c0_i32_0 : i32, i32
  }
  func.func @transform_12(%arg0: i32) -> (i32, i32) {
    %c0_i32 = arith.constant 0 : i32
    %c0_i32_0 = arith.constant 0 : i32
    %c0_i32_1 = arith.constant 0 : i32
    return %c0_i32, %c0_i32_0 : i32, i32
  }
  func.func @transform_13(%arg0: i32) -> (i32, i32) {
    %c0_i32 = arith.constant 0 : i32
    %c0_i32_0 = arith.constant 0 : i32
    return %arg0, %c0_i32 : i32, i32
  }
}

module attributes {stable_mosaic.version = 11 : i64} {
  func.func @_to_edge_kernel(%arg0: i32, %arg1: memref<24x8xf32, #tpu.memory_space<vmem>>, %arg2: memref<24x8xf32, #tpu.memory_space<vmem>>, %arg3: memref<24x4xf32, #tpu.memory_space<vmem>>, %arg4: memref<24x4xf32, #tpu.memory_space<vmem>>, %arg5: memref<8x48xf32, #tpu.memory_space<vmem>>, %arg6: memref<8x48xf32, #tpu.memory_space<vmem>>, %arg7: memref<4x48xf32, #tpu.memory_space<vmem>>, %arg8: memref<4x48xf32, #tpu.memory_space<vmem>>, %arg9: memref<1x48xf32, #tpu.memory_space<vmem>>, %arg10: memref<48x65xf32, #tpu.memory_space<vmem>>, %arg11: memref<1x65xf32, #tpu.memory_space<vmem>>, %arg12: memref<64x16xf32, #tpu.memory_space<vmem>>, %arg13: memref<1x16xf32, #tpu.memory_space<vmem>>, %arg14: memref<24x16xf32, #tpu.memory_space<vmem>>) attributes {dimension_semantics = [#tpu.dimension_semantics<parallel>], iteration_bounds = array<i64: 1>, scalar_prefetch = 0 : i64, scratch_operands = 0 : i64, tpu.core_type = #tpu.core_type<tc>, window_params = [{transform_indices = @transform_0, window_bounds = array<i64: 24, 8>}, {transform_indices = @transform_1, window_bounds = array<i64: 24, 8>}, {transform_indices = @transform_2, window_bounds = array<i64: 24, 4>}, {transform_indices = @transform_3, window_bounds = array<i64: 24, 4>}, {pipeline_mode = #tpu.pipeline_mode<synchronous>, transform_indices = @transform_4, window_bounds = array<i64: 8, 48>}, {pipeline_mode = #tpu.pipeline_mode<synchronous>, transform_indices = @transform_5, window_bounds = array<i64: 8, 48>}, {pipeline_mode = #tpu.pipeline_mode<synchronous>, transform_indices = @transform_6, window_bounds = array<i64: 4, 48>}, {pipeline_mode = #tpu.pipeline_mode<synchronous>, transform_indices = @transform_7, window_bounds = array<i64: 4, 48>}, {pipeline_mode = #tpu.pipeline_mode<synchronous>, transform_indices = @transform_8, window_bounds = array<i64: 1, 48>}, {pipeline_mode = #tpu.pipeline_mode<synchronous>, transform_indices = @transform_9, window_bounds = array<i64: 48, 65>}, {pipeline_mode = #tpu.pipeline_mode<synchronous>, transform_indices = @transform_10, window_bounds = array<i64: 1, 65>}, {pipeline_mode = #tpu.pipeline_mode<synchronous>, transform_indices = @transform_11, window_bounds = array<i64: 64, 16>}, {pipeline_mode = #tpu.pipeline_mode<synchronous>, transform_indices = @transform_12, window_bounds = array<i64: 1, 16>}, {transform_indices = @transform_13, window_bounds = array<i64: 24, 16>}]} {
    %c0 = arith.constant 0 : index
    %c0_0 = arith.constant 0 : index
    %0 = vector.load %arg1[%c0, %c0_0] : memref<24x8xf32, #tpu.memory_space<vmem>>, vector<24x8xf32>
    %c0_1 = arith.constant 0 : index
    %c0_2 = arith.constant 0 : index
    %1 = vector.load %arg5[%c0_1, %c0_2] : memref<8x48xf32, #tpu.memory_space<vmem>>, vector<8x48xf32>
    %cst = arith.constant dense<0.000000e+00> : vector<24x48xf32>
    %2 = tpu.matmul %0, %1, %cst {dimension_numbers = #tpu.dot_dimension_numbers<[1], [0], [0], [1], [0, 0, 1, 1], [], []>} : vector<24x8xf32>, vector<8x48xf32>, vector<24x48xf32> -> vector<24x48xf32>
    %c0_3 = arith.constant 0 : index
    %c0_4 = arith.constant 0 : index
    %3 = vector.load %arg2[%c0_3, %c0_4] : memref<24x8xf32, #tpu.memory_space<vmem>>, vector<24x8xf32>
    %c0_5 = arith.constant 0 : index
    %c0_6 = arith.constant 0 : index
    %4 = vector.load %arg6[%c0_5, %c0_6] : memref<8x48xf32, #tpu.memory_space<vmem>>, vector<8x48xf32>
    %cst_7 = arith.constant dense<0.000000e+00> : vector<24x48xf32>
    %5 = tpu.matmul %3, %4, %cst_7 {dimension_numbers = #tpu.dot_dimension_numbers<[1], [0], [0], [1], [0, 0, 1, 1], [], []>} : vector<24x8xf32>, vector<8x48xf32>, vector<24x48xf32> -> vector<24x48xf32>
    %6 = arith.addf %2, %5 : vector<24x48xf32>
    %c0_8 = arith.constant 0 : index
    %c0_9 = arith.constant 0 : index
    %7 = vector.load %arg3[%c0_8, %c0_9] : memref<24x4xf32, #tpu.memory_space<vmem>>, vector<24x4xf32>
    %c0_10 = arith.constant 0 : index
    %c0_11 = arith.constant 0 : index
    %8 = vector.load %arg7[%c0_10, %c0_11] : memref<4x48xf32, #tpu.memory_space<vmem>>, vector<4x48xf32>
    %cst_12 = arith.constant dense<0.000000e+00> : vector<24x48xf32>
    %9 = tpu.matmul %7, %8, %cst_12 {dimension_numbers = #tpu.dot_dimension_numbers<[1], [0], [0], [1], [0, 0, 1, 1], [], []>} : vector<24x4xf32>, vector<4x48xf32>, vector<24x48xf32> -> vector<24x48xf32>
    %10 = arith.addf %6, %9 : vector<24x48xf32>
    %c0_13 = arith.constant 0 : index
    %c0_14 = arith.constant 0 : index
    %11 = vector.load %arg4[%c0_13, %c0_14] : memref<24x4xf32, #tpu.memory_space<vmem>>, vector<24x4xf32>
    %c0_15 = arith.constant 0 : index
    %c0_16 = arith.constant 0 : index
    %12 = vector.load %arg8[%c0_15, %c0_16] : memref<4x48xf32, #tpu.memory_space<vmem>>, vector<4x48xf32>
    %cst_17 = arith.constant dense<0.000000e+00> : vector<24x48xf32>
    %13 = tpu.matmul %11, %12, %cst_17 {dimension_numbers = #tpu.dot_dimension_numbers<[1], [0], [0], [1], [0, 0, 1, 1], [], []>} : vector<24x4xf32>, vector<4x48xf32>, vector<24x48xf32> -> vector<24x48xf32>
    %14 = arith.addf %10, %13 : vector<24x48xf32>
    %c0_18 = arith.constant 0 : index
    %c0_19 = arith.constant 0 : index
    %15 = vector.load %arg9[%c0_18, %c0_19] : memref<1x48xf32, #tpu.memory_space<vmem>>, vector<1x48xf32>
    %16 = vector.broadcast %15 : vector<1x48xf32> to vector<24x48xf32>
    %17 = arith.addf %14, %16 : vector<24x48xf32>
    %cst_20 = arith.constant 0.000000e+00 : f32
    %18 = vector.broadcast %cst_20 : f32 to vector<24x48xf32>
    %19 = arith.maximumf %17, %18 : vector<24x48xf32>
    %c0_21 = arith.constant 0 : index
    %c0_22 = arith.constant 0 : index
    %20 = vector.load %arg10[%c0_21, %c0_22] : memref<48x65xf32, #tpu.memory_space<vmem>>, vector<48x65xf32>
    %cst_23 = arith.constant dense<0.000000e+00> : vector<24x65xf32>
    %21 = tpu.matmul %19, %20, %cst_23 {dimension_numbers = #tpu.dot_dimension_numbers<[1], [0], [0], [1], [0, 0, 1, 1], [], []>} : vector<24x48xf32>, vector<48x65xf32>, vector<24x65xf32> -> vector<24x65xf32>
    %c0_24 = arith.constant 0 : index
    %c0_25 = arith.constant 0 : index
    %22 = vector.load %arg11[%c0_24, %c0_25] : memref<1x65xf32, #tpu.memory_space<vmem>>, vector<1x65xf32>
    %23 = vector.broadcast %22 : vector<1x65xf32> to vector<24x65xf32>
    %24 = arith.addf %21, %23 : vector<24x65xf32>
    %25 = vector.extract_strided_slice %24 {offsets = [0, 64], sizes = [24, 1], strides = [1, 1]} : vector<24x65xf32> to vector<24x1xf32>
    %26 = arith.negf %25 : vector<24x1xf32>
    %27 = math.exp %26 : vector<24x1xf32>
    %cst_26 = arith.constant 1.000000e+00 : f32
    %28 = vector.broadcast %cst_26 : f32 to vector<24x1xf32>
    %29 = arith.addf %28, %27 : vector<24x1xf32>
    %30 = arith.divf %28, %29 : vector<24x1xf32>
    %31 = vector.extract_strided_slice %24 {offsets = [0, 0], sizes = [24, 64], strides = [1, 1]} : vector<24x65xf32> to vector<24x64xf32>
    %32 = vector.broadcast %30 : vector<24x1xf32> to vector<24x64xf32>
    %33 = arith.mulf %31, %32 : vector<24x64xf32>
    %c0_27 = arith.constant 0 : index
    %c0_28 = arith.constant 0 : index
    %34 = vector.load %arg12[%c0_27, %c0_28] : memref<64x16xf32, #tpu.memory_space<vmem>>, vector<64x16xf32>
    %cst_29 = arith.constant dense<0.000000e+00> : vector<24x16xf32>
    %35 = tpu.matmul %33, %34, %cst_29 {dimension_numbers = #tpu.dot_dimension_numbers<[1], [0], [0], [1], [0, 0, 1, 1], [], []>} : vector<24x64xf32>, vector<64x16xf32>, vector<24x16xf32> -> vector<24x16xf32>
    %c0_30 = arith.constant 0 : index
    %c0_31 = arith.constant 0 : index
    %36 = vector.load %arg13[%c0_30, %c0_31] : memref<1x16xf32, #tpu.memory_space<vmem>>, vector<1x16xf32>
    %37 = vector.broadcast %36 : vector<1x16xf32> to vector<24x16xf32>
    %38 = arith.addf %35, %37 : vector<24x16xf32>
    %c0_32 = arith.constant 0 : index
    %c0_33 = arith.constant 0 : index
    %39 = vector.load %arg14[%c0_32, %c0_33] : memref<24x16xf32, #tpu.memory_space<vmem>>, vector<24x16xf32>
    tpu.vector_store %arg14[%c0_32, %c0_33], %38 {strides = array<i32>} : memref<24x16xf32, #tpu.memory_space<vmem>>, vector<24x16xf32>,
    return
  }
  func.func @transform_0(%arg0: i32) -> (i32, i32) {
    %c0_i32 = arith.constant 0 : i32
    %c0_i32_0 = arith.constant 0 : i32
    return %arg0, %c0_i32 : i32, i32
  }
  func.func @transform_1(%arg0: i32) -> (i32, i32) {
    %c0_i32 = arith.constant 0 : i32
    %c0_i32_0 = arith.constant 0 : i32
    return %arg0, %c0_i32 : i32, i32
  }
  func.func @transform_2(%arg0: i32) -> (i32, i32) {
    %c0_i32 = arith.constant 0 : i32
    %c0_i32_0 = arith.constant 0 : i32
    return %arg0, %c0_i32 : i32, i32
  }
  func.func @transform_3(%arg0: i32) -> (i32, i32) {
    %c0_i32 = arith.constant 0 : i32
    %c0_i32_0 = arith.constant 0 : i32
    return %arg0, %c0_i32 : i32, i32
  }
  func.func @transform_4(%arg0: i32) -> (i32, i32) {
    %c0_i32 = arith.constant 0 : i32
    %c0_i32_0 = arith.constant 0 : i32
    %c0_i32_1 = arith.constant 0 : i32
    return %c0_i32, %c0_i32_0 : i32, i32
  }
  func.func @transform_5(%arg0: i32) -> (i32, i32) {
    %c0_i32 = arith.constant 0 : i32
    %c0_i32_0 = arith.constant 0 : i32
    %c0_i32_1 = arith.constant 0 : i32
    return %c0_i32, %c0_i32_0 : i32, i32
  }
  func.func @transform_6(%arg0: i32) -> (i32, i32) {
    %c0_i32 = arith.constant 0 : i32
    %c0_i32_0 = arith.constant 0 : i32
    %c0_i32_1 = arith.constant 0 : i32
    return %c0_i32, %c0_i32_0 : i32, i32
  }
  func.func @transform_7(%arg0: i32) -> (i32, i32) {
    %c0_i32 = arith.constant 0 : i32
    %c0_i32_0 = arith.constant 0 : i32
    %c0_i32_1 = arith.constant 0 : i32
    return %c0_i32, %c0_i32_0 : i32, i32
  }
  func.func @transform_8(%arg0: i32) -> (i32, i32) {
    %c0_i32 = arith.constant 0 : i32
    %c0_i32_0 = arith.constant 0 : i32
    %c0_i32_1 = arith.constant 0 : i32
    return %c0_i32, %c0_i32_0 : i32, i32
  }
  func.func @transform_9(%arg0: i32) -> (i32, i32) {
    %c0_i32 = arith.constant 0 : i32
    %c0_i32_0 = arith.constant 0 : i32
    %c0_i32_1 = arith.constant 0 : i32
    return %c0_i32, %c0_i32_0 : i32, i32
  }
  func.func @transform_10(%arg0: i32) -> (i32, i32) {
    %c0_i32 = arith.constant 0 : i32
    %c0_i32_0 = arith.constant 0 : i32
    %c0_i32_1 = arith.constant 0 : i32
    return %c0_i32, %c0_i32_0 : i32, i32
  }
  func.func @transform_11(%arg0: i32) -> (i32, i32) {
    %c0_i32 = arith.constant 0 : i32
    %c0_i32_0 = arith.constant 0 : i32
    %c0_i32_1 = arith.constant 0 : i32
    return %c0_i32, %c0_i32_0 : i32, i32
  }
  func.func @transform_12(%arg0: i32) -> (i32, i32) {
    %c0_i32 = arith.constant 0 : i32
    %c0_i32_0 = arith.constant 0 : i32
    %c0_i32_1 = arith.constant 0 : i32
    return %c0_i32, %c0_i32_0 : i32, i32
  }
  func.func @transform_13(%arg0: i32) -> (i32, i32) {
    %c0_i32 = arith.constant 0 : i32
    %c0_i32_0 = arith.constant 0 : i32
    return %arg0, %c0_i32 : i32, i32
  }
}

</mosaic_0001>

<llo_original>
// kernel: tpu_custom_call.1
$region0: #{tpu_custom_call.1}
  #allocation0 [shape = 'u32[]', space=smem, size = 0x4, offset = 0x4, fixed_abs, tag = 'smem constant byte address 0x4 - core index']
  #allocation1 [shape = 'u32[144,128]{1,0:T(1,128)}', space=vmem, size = 0x12000, scoped, tag = 'internal scratch']
  %s0 = inlined_call_operand.vmem [shape: f32[24,8], index: 0, kind: input, shape index: {}]
  %s1 = inlined_call_operand.vmem [shape: f32[24,8], index: 1, kind: input, shape index: {}]
  %s2 = inlined_call_operand.vmem [shape: f32[24,4], index: 2, kind: input, shape index: {}]
  %s3 = inlined_call_operand.vmem [shape: f32[24,4], index: 3, kind: input, shape index: {}]
  %s4 = inlined_call_operand.vmem [shape: f32[8,48], index: 4, kind: input, shape index: {}]
  %s5 = inlined_call_operand.vmem [shape: f32[8,48], index: 5, kind: input, shape index: {}]
  %s6 = inlined_call_operand.vmem [shape: f32[4,48], index: 6, kind: input, shape index: {}]
  %s7 = inlined_call_operand.vmem [shape: f32[4,48], index: 7, kind: input, shape index: {}]
  %s8 = inlined_call_operand.vmem [shape: f32[1,48], index: 8, kind: input, shape index: {}]
  %s9 = inlined_call_operand.vmem [shape: f32[48,65], index: 9, kind: input, shape index: {}]
  %s10 = inlined_call_operand.vmem [shape: f32[1,65], index: 10, kind: input, shape index: {}]
  %s11 = inlined_call_operand.vmem [shape: f32[64,16], index: 11, kind: input, shape index: {}]
  %s12 = inlined_call_operand.vmem [shape: f32[1,16], index: 12, kind: input, shape index: {}]
  %s13 = inlined_call_operand.vmem [shape: f32[24,16], index: 13, kind: output, shape index: {}]
  %s14 = sld [smem:[#allocation0]]
  $region62: #{tpu_custom_call.1} parent=0
    _
  %s16 = ssub.s32 1, %s14
  %s17 = scalar_select 0, %s16, %s14
  // Predicated region
  $region2: #{tpu_custom_call.1} parent=0 // pred_check
    _
  $region3: #{tpu_custom_call.1} parent=0 // pred_check_branch
    %19 = sbr.rel (0) target = $region5
  $region4: #{tpu_custom_call.1} parent=0 // pred_region
    _
  $region5: #{tpu_custom_call.1} parent=0 // pred_fallthru
    _
  // Predicated region
  $region6: #{tpu_custom_call.1} parent=0 // pred_check
    _
  $region7: #{tpu_custom_call.1} parent=0 // pred_check_branch
    %21 = sbr.rel (0) target = $region9
  $region8: #{tpu_custom_call.1} parent=0 // pred_region
    _
  $region9: #{tpu_custom_call.1} parent=0 // pred_fallthru
    _
  // Predicated region
  $region10: #{tpu_custom_call.1} parent=0 // pred_check
    _
  $region11: #{tpu_custom_call.1} parent=0 // pred_check_branch
    %23 = sbr.rel (0) target = $region13
  $region12: #{tpu_custom_call.1} parent=0 // pred_region
    _
  $region13: #{tpu_custom_call.1} parent=0 // pred_fallthru
    _
  // Predicated region
  $region14: #{tpu_custom_call.1} parent=0 // pred_check
    _
  $region15: #{tpu_custom_call.1} parent=0 // pred_check_branch
    %25 = sbr.rel (0) target = $region17
  $region16: #{tpu_custom_call.1} parent=0 // pred_region
    _
  $region17: #{tpu_custom_call.1} parent=0 // pred_fallthru
    _
  // Predicated region
  $region18: #{tpu_custom_call.1} parent=0 // pred_check
    _
  $region19: #{tpu_custom_call.1} parent=0 // pred_check_branch
    %27 = sbr.rel (0) target = $region21
  $region20: #{tpu_custom_call.1} parent=0 // pred_region
    _
  $region21: #{tpu_custom_call.1} parent=0 // pred_fallthru
    _
  // Predicated region
  $region22: #{tpu_custom_call.1} parent=0 // pred_check
    _
  $region23: #{tpu_custom_call.1} parent=0 // pred_check_branch
    %29 = sbr.rel (0) target = $region25
  $region24: #{tpu_custom_call.1} parent=0 // pred_region
    _
  $region25: #{tpu_custom_call.1} parent=0 // pred_fallthru
    _
  // Predicated region
  $region26: #{tpu_custom_call.1} parent=0 // pred_check
    _
  $region27: #{tpu_custom_call.1} parent=0 // pred_check_branch
    %31 = sbr.rel (0) target = $region29
  $region28: #{tpu_custom_call.1} parent=0 // pred_region
    _
  $region29: #{tpu_custom_call.1} parent=0 // pred_fallthru
    _
  // Predicated region
  $region30: #{tpu_custom_call.1} parent=0 // pred_check
    _
  $region31: #{tpu_custom_call.1} parent=0 // pred_check_branch
    %33 = sbr.rel (0) target = $region33
  $region32: #{tpu_custom_call.1} parent=0 // pred_region
    _
  $region33: #{tpu_custom_call.1} parent=0 // pred_fallthru
    _
  // Predicated region
  $region34: #{tpu_custom_call.1} parent=0 // pred_check
    _
  $region35: #{tpu_custom_call.1} parent=0 // pred_check_branch
    %35 = sbr.rel (0) target = $region37
  $region36: #{tpu_custom_call.1} parent=0 // pred_region
    _
  $region37: #{tpu_custom_call.1} parent=0 // pred_fallthru
    _
  // Predicated region
  $region38: #{tpu_custom_call.1} parent=0 // pred_check
    _
  $region39: #{tpu_custom_call.1} parent=0 // pred_check_branch
    %37 = sbr.rel (0) target = $region41
  $region40: #{tpu_custom_call.1} parent=0 // pred_region
    _
  $region41: #{tpu_custom_call.1} parent=0 // pred_fallthru
    _
  // Predicated region
  $region42: #{tpu_custom_call.1} parent=0 // pred_check
    _
  $region43: #{tpu_custom_call.1} parent=0 // pred_check_branch
    %39 = sbr.rel (0) target = $region45
  $region44: #{tpu_custom_call.1} parent=0 // pred_region
    _
  $region45: #{tpu_custom_call.1} parent=0 // pred_fallthru
    _
  // Predicated region
  $region46: #{tpu_custom_call.1} parent=0 // pred_check
    _
  $region47: #{tpu_custom_call.1} parent=0 // pred_check_branch
    %41 = sbr.rel (0) target = $region49
  $region48: #{tpu_custom_call.1} parent=0 // pred_region
    _
  $region49: #{tpu_custom_call.1} parent=0 // pred_fallthru
    _
  // Predicated region
  $region50: #{tpu_custom_call.1} parent=0 // pred_check
    _
  $region51: #{tpu_custom_call.1} parent=0 // pred_check_branch
    %43 = sbr.rel (0) target = $region53
  $region52: #{tpu_custom_call.1} parent=0 // pred_region
    _
  $region53: #{tpu_custom_call.1} parent=0 // pred_fallthru
    _
  %v44 = vld [vmem:[%s0] sm:$0xff]
  %v45 = vld [vmem:[%s0 + $0x8] sm:$0xff]
  %v46 = vld [vmem:[%s0 + $0x10] sm:$0xff]
  %v47 = vld [vmem:[%s4] sm:$0xff]
  %v48 = vld [vmem:[%s1] sm:$0xff]
  %v49 = vld [vmem:[%s1 + $0x8] sm:$0xff]
  %v50 = vld [vmem:[%s1 + $0x10] sm:$0xff]
  %v51 = vld [vmem:[%s5] sm:$0xff]
  %vm52 = vcmask 64512
  %v54 = vsel %vm52, %v48, 0
  %v57 = vsel %vm52, %v49, 0
  %v60 = vsel %vm52, %v50, 0
  %62 = vmatprep.subr.mxu0 0.0
  %63 = vmatpush1.msra.mxu0 %v51
  %64 = vmatprep.subr.mxu0 0.0
  %65 = vmatpush1.msra.mxu0 0.0
  %66 = vmatprep.subr.mxu0 0.0
  %67 = vmatpush1.msra.mxu0 0.0
  %68 = vmatprep.subr.mxu0 0.0
  %69 = vmatpush1.msra.mxu0 0.0
  %70 = vmatprep.subr.mxu0 0.0
  %71 = vmatpush1.msra.mxu0 0.0
  %72 = vmatprep.subr.mxu0 0.0
  %73 = vmatpush1.msra.mxu0 0.0
  %74 = vmatprep.subr.mxu0 0.0
  %75 = vmatpush1.msra.mxu0 0.0
  %76 = vmatprep.subr.mxu0 0.0
  %77 = vmatpush1.msra.mxu0 0.0
  %78 = vmatprep.subr.mxu0 0.0
  %79 = vmatpush1.msra.mxu0 0.0
  %80 = vmatprep.subr.mxu0 0.0
  %81 = vmatpush1.msra.mxu0 0.0
  %82 = vmatprep.subr.mxu0 0.0
  %83 = vmatpush1.msra.mxu0 0.0
  %84 = vmatprep.subr.mxu0 0.0
  %85 = vmatpush1.msra.mxu0 0.0
  %86 = vmatprep.subr.mxu0 0.0
  %87 = vmatpush1.msra.mxu0 0.0
  %88 = vmatprep.subr.mxu0 0.0
  %89 = vmatpush1.msra.mxu0 0.0
  %90 = vmatprep.subr.mxu0 0.0
  %91 = vmatpush1.msra.mxu0 0.0
  %92 = vmatprep.subr.mxu0 0.0
  %93 = vmatpush1.msra.mxu0 0.0
  %94 = vmatprep.subr.mxu0 0.0
  %95 = vmatpush1.msra.mxu0 0.0
  %96 = vmatprep.subr.mxu0 0.0
  %97 = vmatpush1.msra.mxu0 0.0
  %98 = vmatprep.subr.mxu0 0.0
  %99 = vmatpush1.msra.mxu0 0.0
  %100 = vmatprep.subr.mxu0 0.0
  %101 = vmatpush1.msra.mxu0 0.0
  %102 = vmatprep.subr.mxu0 0.0
  %103 = vmatpush1.msra.mxu0 0.0
  %104 = vmatprep.subr.mxu0 0.0
  %105 = vmatpush1.msra.mxu0 0.0
  %106 = vmatprep.subr.mxu0 0.0
  %107 = vmatpush1.msra.mxu0 0.0
  %108 = vmatprep.subr.mxu0 0.0
  %109 = vmatpush1.msra.mxu0 0.0
  %110 = vmatprep.subr.mxu0 0.0
  %111 = vmatpush1.msra.mxu0 0.0
  %112 = vmatprep.subr.mxu0 0.0
  %113 = vmatpush1.msra.mxu0 0.0
  %114 = vmatprep.subr.mxu0 0.0
  %115 = vmatpush1.msra.mxu0 0.0
  %116 = vmatprep.subr.mxu0 0.0
  %117 = vmatpush1.msra.mxu0 0.0
  %118 = vmatprep.subr.mxu0 0.0
  %119 = vmatpush1.msra.mxu0 0.0
  %120 = vmatprep.subr.mxu0 0.0
  %121 = vmatpush1.msra.mxu0 0.0
  %122 = vmatprep.subr.mxu0 0.0
  %123 = vmatpush1.msra.mxu0 0.0
  %124 = vmatprep.subr.mxu0 0.0
  %125 = vmatpush1.msra.mxu0 0.0
  %126 = vmatprep.mubr.f32.mxu0 0.0
  %127 = vmatmul.mubr.f32.gmra.mrb[0].mxu0 %v54
  %v128 = vpop.f32.mrb[0].mxu0
  %v129 = vadd.f32 0.0, %v128
  %v130 = vpop.f32.mrb[0].mxu0
  %131 = vmatprep.mubr.f32.mxu0 0.0
  %132 = vmatmul.mubr.f32.gmra.mrb[0].mxu0 %v57
  %v133 = vpop.f32.mrb[0].mxu0
  %v134 = vadd.f32 0.0, %v133
  %v135 = vpop.f32.mrb[0].mxu0
  %136 = vmatprep.mubr.f32.mxu0 0.0
  %137 = vmatmul.mubr.f32.gmra.mrb[0].mxu0 %v60
  %v138 = vpop.f32.mrb[0].mxu0
  %v139 = vadd.f32 0.0, %v138
  %v140 = vpop.f32.mrb[0].mxu0
  %141 = vdwg.mxu0
  %v143 = vsel %vm52, %v44, 0
  %v146 = vsel %vm52, %v45, 0
  %v149 = vsel %vm52, %v46, 0
  %151 = vmatprep.subr.mxu0 0.0
  %152 = vmatpush1.msra.mxu0 %v47
  %153 = vmatprep.subr.mxu0 0.0
  %154 = vmatpush1.msra.mxu0 0.0
  %155 = vmatprep.subr.mxu0 0.0
  %156 = vmatpush1.msra.mxu0 0.0
  %157 = vmatprep.subr.mxu0 0.0
  %158 = vmatpush1.msra.mxu0 0.0
  %159 = vmatprep.subr.mxu0 0.0
  %160 = vmatpush1.msra.mxu0 0.0
  %161 = vmatprep.subr.mxu0 0.0
  %162 = vmatpush1.msra.mxu0 0.0
  %163 = vmatprep.subr.mxu0 0.0
  %164 = vmatpush1.msra.mxu0 0.0
  %165 = vmatprep.subr.mxu0 0.0
  %166 = vmatpush1.msra.mxu0 0.0
  %167 = vmatprep.subr.mxu0 0.0
  %168 = vmatpush1.msra.mxu0 0.0
  %169 = vmatprep.subr.mxu0 0.0
  %170 = vmatpush1.msra.mxu0 0.0
  %171 = vmatprep.subr.mxu0 0.0
  %172 = vmatpush1.msra.mxu0 0.0
  %173 = vmatprep.subr.mxu0 0.0
  %174 = vmatpush1.msra.mxu0 0.0
  %175 = vmatprep.subr.mxu0 0.0
  %176 = vmatpush1.msra.mxu0 0.0
  %177 = vmatprep.subr.mxu0 0.0
  %178 = vmatpush1.msra.mxu0 0.0
  %179 = vmatprep.subr.mxu0 0.0
  %180 = vmatpush1.msra.mxu0 0.0
  %181 = vmatprep.subr.mxu0 0.0
  %182 = vmatpush1.msra.mxu0 0.0
  %183 = vmatprep.subr.mxu0 0.0
  %184 = vmatpush1.msra.mxu0 0.0
  %185 = vmatprep.subr.mxu0 0.0
  %186 = vmatpush1.msra.mxu0 0.0
  %187 = vmatprep.subr.mxu0 0.0
  %188 = vmatpush1.msra.mxu0 0.0
  %189 = vmatprep.subr.mxu0 0.0
  %190 = vmatpush1.msra.mxu0 0.0
  %191 = vmatprep.subr.mxu0 0.0
  %192 = vmatpush1.msra.mxu0 0.0
  %193 = vmatprep.subr.mxu0 0.0
  %194 = vmatpush1.msra.mxu0 0.0
  %195 = vmatprep.subr.mxu0 0.0
  %196 = vmatpush1.msra.mxu0 0.0
  %197 = vmatprep.subr.mxu0 0.0
  %198 = vmatpush1.msra.mxu0 0.0
  %199 = vmatprep.subr.mxu0 0.0
  %200 = vmatpush1.msra.mxu0 0.0
  %201 = vmatprep.subr.mxu0 0.0
  %202 = vmatpush1.msra.mxu0 0.0
  %203 = vmatprep.subr.mxu0 0.0
  %204 = vmatpush1.msra.mxu0 0.0
  %205 = vmatprep.subr.mxu0 0.0
  %206 = vmatpush1.msra.mxu0 0.0
  %207 = vmatprep.subr.mxu0 0.0
  %208 = vmatpush1.msra.mxu0 0.0
  %209 = vmatprep.subr.mxu0 0.0
  %210 = vmatpush1.msra.mxu0 0.0
  %211 = vmatprep.subr.mxu0 0.0
  %212 = vmatpush1.msra.mxu0 0.0
  %213 = vmatprep.subr.mxu0 0.0
  %214 = vmatpush1.msra.mxu0 0.0
  %215 = vmatprep.mubr.f32.mxu0 0.0
  %216 = vmatmul.mubr.f32.gmra.mrb[0].mxu0 %v143
  %v217 = vpop.f32.mrb[0].mxu0
  %v218 = vadd.f32 %v129, %v217
  %v219 = vpop.f32.mrb[0].mxu0
  %220 = vmatprep.mubr.f32.mxu0 0.0
  %221 = vmatmul.mubr.f32.gmra.mrb[0].mxu0 %v146
  %v222 = vpop.f32.mrb[0].mxu0
  %v223 = vadd.f32 %v134, %v222
  %v224 = vpop.f32.mrb[0].mxu0
  %225 = vmatprep.mubr.f32.mxu0 0.0
  %226 = vmatmul.mubr.f32.gmra.mrb[0].mxu0 %v149
  %v227 = vpop.f32.mrb[0].mxu0
  %v228 = vadd.f32 %v139, %v227
  %v229 = vpop.f32.mrb[0].mxu0
  %230 = vdwg.mxu0
  %v231 = vld [vmem:[%s2] sm:$0xff]
  %v232 = vld [vmem:[%s2 + $0x8] sm:$0xff]
  %v233 = vld [vmem:[%s2 + $0x10] sm:$0xff]
  %v234 = vld [vmem:[%s6] sm:$0xf]
  %vm235 = vcmask 31744
  %v237 = vsel %vm235, %v231, 0
  %v240 = vsel %vm235, %v232, 0
  %v243 = vsel %vm235, %v233, 0
  %vm245 = vcmask 1043456
  %v247 = vsel %vm245, %v234, 0
  %249 = vmatprep.subr.mxu0 0.0
  %250 = vmatpush1.msra.mxu0 %v247
  %251 = vmatprep.subr.mxu0 0.0
  %252 = vmatpush1.msra.mxu0 0.0
  %253 = vmatprep.subr.mxu0 0.0
  %254 = vmatpush1.msra.mxu0 0.0
  %255 = vmatprep.subr.mxu0 0.0
  %256 = vmatpush1.msra.mxu0 0.0
  %257 = vmatprep.subr.mxu0 0.0
  %258 = vmatpush1.msra.mxu0 0.0
  %259 = vmatprep.subr.mxu0 0.0
  %260 = vmatpush1.msra.mxu0 0.0
  %261 = vmatprep.subr.mxu0 0.0
  %262 = vmatpush1.msra.mxu0 0.0
  %263 = vmatprep.subr.mxu0 0.0
  %264 = vmatpush1.msra.mxu0 0.0
  %265 = vmatprep.subr.mxu0 0.0
  %266 = vmatpush1.msra.mxu0 0.0
  %267 = vmatprep.subr.mxu0 0.0
  %268 = vmatpush1.msra.mxu0 0.0
  %269 = vmatprep.subr.mxu0 0.0
  %270 = vmatpush1.msra.mxu0 0.0
  %271 = vmatprep.subr.mxu0 0.0
  %272 = vmatpush1.msra.mxu0 0.0
  %273 = vmatprep.subr.mxu0 0.0
  %274 = vmatpush1.msra.mxu0 0.0
  %275 = vmatprep.subr.mxu0 0.0
  %276 = vmatpush1.msra.mxu0 0.0
  %277 = vmatprep.subr.mxu0 0.0
  %278 = vmatpush1.msra.mxu0 0.0
  %279 = vmatprep.subr.mxu0 0.0
  %280 = vmatpush1.msra.mxu0 0.0
  %281 = vmatprep.subr.mxu0 0.0
  %282 = vmatpush1.msra.mxu0 0.0
  %283 = vmatprep.subr.mxu0 0.0
  %284 = vmatpush1.msra.mxu0 0.0
  %285 = vmatprep.subr.mxu0 0.0
  %286 = vmatpush1.msra.mxu0 0.0
  %287 = vmatprep.subr.mxu0 0.0
  %288 = vmatpush1.msra.mxu0 0.0
  %289 = vmatprep.subr.mxu0 0.0
  %290 = vmatpush1.msra.mxu0 0.0
  %291 = vmatprep.subr.mxu0 0.0
  %292 = vmatpush1.msra.mxu0 0.0
  %293 = vmatprep.subr.mxu0 0.0
  %294 = vmatpush1.msra.mxu0 0.0
  %295 = vmatprep.subr.mxu0 0.0
  %296 = vmatpush1.msra.mxu0 0.0
  %297 = vmatprep.subr.mxu0 0.0
  %298 = vmatpush1.msra.mxu0 0.0
  %299 = vmatprep.subr.mxu0 0.0
  %300 = vmatpush1.msra.mxu0 0.0
  %301 = vmatprep.subr.mxu0 0.0
  %302 = vmatpush1.msra.mxu0 0.0
  %303 = vmatprep.subr.mxu0 0.0
  %304 = vmatpush1.msra.mxu0 0.0
  %305 = vmatprep.subr.mxu0 0.0
  %306 = vmatpush1.msra.mxu0 0.0
  %307 = vmatprep.subr.mxu0 0.0
  %308 = vmatpush1.msra.mxu0 0.0
  %309 = vmatprep.subr.mxu0 0.0
  %310 = vmatpush1.msra.mxu0 0.0
  %311 = vmatprep.subr.mxu0 0.0
  %312 = vmatpush1.msra.mxu0 0.0
  %313 = vmatprep.mubr.f32.mxu0 0.0
  %314 = vmatmul.mubr.f32.gmra.mrb[0].mxu0 %v237
  %v315 = vpop.f32.mrb[0].mxu0
  %v316 = vadd.f32 0.0, %v315
  %v317 = vpop.f32.mrb[0].mxu0
  %318 = vmatprep.mubr.f32.mxu0 0.0
  %319 = vmatmul.mubr.f32.gmra.mrb[0].mxu0 %v240
  %v320 = vpop.f32.mrb[0].mxu0
  %v321 = vadd.f32 0.0, %v320
  %v322 = vpop.f32.mrb[0].mxu0
  %323 = vmatprep.mubr.f32.mxu0 0.0
  %324 = vmatmul.mubr.f32.gmra.mrb[0].mxu0 %v243
  %v325 = vpop.f32.mrb[0].mxu0
  %v326 = vadd.f32 0.0, %v325
  %v327 = vpop.f32.mrb[0].mxu0
  %328 = vdwg.mxu0
  %v329 = vadd.f32 %v218, %v316
  %v330 = vadd.f32 %v223, %v321
  %v331 = vadd.f32 %v228, %v326
  %v332 = vld [vmem:[%s3] sm:$0xff]
  %v333 = vld [vmem:[%s3 + $0x8] sm:$0xff]
  %v334 = vld [vmem:[%s3 + $0x10] sm:$0xff]
  %v335 = vld [vmem:[%s7] sm:$0xf]
  %v337 = vsel %vm235, %v332, 0
  %v340 = vsel %vm235, %v333, 0
  %v343 = vsel %vm235, %v334, 0
  %v346 = vsel %vm245, %v335, 0
  %348 = vmatprep.subr.mxu0 0.0
  %349 = vmatpush1.msra.mxu0 %v346
  %350 = vmatprep.subr.mxu0 0.0
  %351 = vmatpush1.msra.mxu0 0.0
  %352 = vmatprep.subr.mxu0 0.0
  %353 = vmatpush1.msra.mxu0 0.0
  %354 = vmatprep.subr.mxu0 0.0
  %355 = vmatpush1.msra.mxu0 0.0
  %356 = vmatprep.subr.mxu0 0.0
  %357 = vmatpush1.msra.mxu0 0.0
  %358 = vmatprep.subr.mxu0 0.0
  %359 = vmatpush1.msra.mxu0 0.0
  %360 = vmatprep.subr.mxu0 0.0
  %361 = vmatpush1.msra.mxu0 0.0
  %362 = vmatprep.subr.mxu0 0.0
  %363 = vmatpush1.msra.mxu0 0.0
  %364 = vmatprep.subr.mxu0 0.0
  %365 = vmatpush1.msra.mxu0 0.0
  %366 = vmatprep.subr.mxu0 0.0
  %367 = vmatpush1.msra.mxu0 0.0
  %368 = vmatprep.subr.mxu0 0.0
  %369 = vmatpush1.msra.mxu0 0.0
  %370 = vmatprep.subr.mxu0 0.0
  %371 = vmatpush1.msra.mxu0 0.0
  %372 = vmatprep.subr.mxu0 0.0
  %373 = vmatpush1.msra.mxu0 0.0
  %374 = vmatprep.subr.mxu0 0.0
  %375 = vmatpush1.msra.mxu0 0.0
  %376 = vmatprep.subr.mxu0 0.0
  %377 = vmatpush1.msra.mxu0 0.0
  %378 = vmatprep.subr.mxu0 0.0
  %379 = vmatpush1.msra.mxu0 0.0
  %380 = vmatprep.subr.mxu0 0.0
  %381 = vmatpush1.msra.mxu0 0.0
  %382 = vmatprep.subr.mxu0 0.0
  %383 = vmatpush1.msra.mxu0 0.0
  %384 = vmatprep.subr.mxu0 0.0
  %385 = vmatpush1.msra.mxu0 0.0
  %386 = vmatprep.subr.mxu0 0.0
  %387 = vmatpush1.msra.mxu0 0.0
  %388 = vmatprep.subr.mxu0 0.0
  %389 = vmatpush1.msra.mxu0 0.0
  %390 = vmatprep.subr.mxu0 0.0
  %391 = vmatpush1.msra.mxu0 0.0
  %392 = vmatprep.subr.mxu0 0.0
  %393 = vmatpush1.msra.mxu0 0.0
  %394 = vmatprep.subr.mxu0 0.0
  %395 = vmatpush1.msra.mxu0 0.0
  %396 = vmatprep.subr.mxu0 0.0
  %397 = vmatpush1.msra.mxu0 0.0
  %398 = vmatprep.subr.mxu0 0.0
  %399 = vmatpush1.msra.mxu0 0.0
  %400 = vmatprep.subr.mxu0 0.0
  %401 = vmatpush1.msra.mxu0 0.0
  %402 = vmatprep.subr.mxu0 0.0
  %403 = vmatpush1.msra.mxu0 0.0
  %404 = vmatprep.subr.mxu0 0.0
  %405 = vmatpush1.msra.mxu0 0.0
  %406 = vmatprep.subr.mxu0 0.0
  %407 = vmatpush1.msra.mxu0 0.0
  %408 = vmatprep.subr.mxu0 0.0
  %409 = vmatpush1.msra.mxu0 0.0
  %410 = vmatprep.subr.mxu0 0.0
  %411 = vmatpush1.msra.mxu0 0.0
  %412 = vmatprep.mubr.f32.mxu0 0.0
  %413 = vmatmul.mubr.f32.gmra.mrb[0].mxu0 %v337
  %v414 = vpop.f32.mrb[0].mxu0
  %v415 = vadd.f32 0.0, %v414
  %v416 = vpop.f32.mrb[0].mxu0
  %417 = vmatprep.mubr.f32.mxu0 0.0
  %418 = vmatmul.mubr.f32.gmra.mrb[0].mxu0 %v340
  %v419 = vpop.f32.mrb[0].mxu0
  %v420 = vadd.f32 0.0, %v419
  %v421 = vpop.f32.mrb[0].mxu0
  %422 = vmatprep.mubr.f32.mxu0 0.0
  %423 = vmatmul.mubr.f32.gmra.mrb[0].mxu0 %v343
  %v424 = vpop.f32.mrb[0].mxu0
  %v425 = vadd.f32 0.0, %v424
  %v426 = vpop.f32.mrb[0].mxu0
  %427 = vdwg.mxu0
  %v428 = vadd.f32 %v329, %v415
  %v429 = vadd.f32 %v330, %v420
  %v430 = vadd.f32 %v331, %v425
  %v431 = vld [vmem:[%s8] sm:$0x1]
  %v433 = vlaneseq
  %v434 = vshrl.u32 %v433, 7
  %v435 = vsub.s32 0, %v434
  %v436 = vrot.slane %v431, %v435
  %v438 = vadd.f32 %v428, %v436
  %v439 = vadd.f32 %v429, %v436
  %v440 = vadd.f32 %v430, %v436
  %v441 = vmax.f32 %v438, 0.0
  %v442 = vmax.f32 %v439, 0.0
  %v443 = vmax.f32 %v440, 0.0
  %v444 = vld [vmem:[%s9] sm:$0xff]
  %v445 = vld [vmem:[%s9 + $0x8] sm:$0xff]
  %v446 = vld [vmem:[%s9 + $0x10] sm:$0xff]
  %v447 = vld [vmem:[%s9 + $0x18] sm:$0xff]
  %v448 = vld [vmem:[%s9 + $0x20] sm:$0xff]
  %v449 = vld [vmem:[%s9 + $0x28] sm:$0xff]
  %v450 = vld [vmem:[%s10] sm:$0x1]
  %v452 = vlaneseq
  %v453 = vshrl.u32 %v452, 7
  %v454 = vsub.s32 0, %v453
  %v455 = vrot.slane %v450, %v454
  %vm457 = vcmask 392192
  %v459 = vsel %vm457, %v441, 0
  %v462 = vsel %vm457, %v442, 0
  %v465 = vsel %vm457, %v443, 0
  %467 = vmatprep.subr.mxu0 0.0
  %468 = vmatpush1.msra.mxu0 %v444
  %469 = vmatprep.subr.mxu0 0.0
  %470 = vmatpush1.msra.mxu0 %v445
  %471 = vmatprep.subr.mxu0 0.0
  %472 = vmatpush1.msra.mxu0 %v446
  %473 = vmatprep.subr.mxu0 0.0
  %474 = vmatpush1.msra.mxu0 %v447
  %475 = vmatprep.subr.mxu0 0.0
  %476 = vmatpush1.msra.mxu0 %v448
  %477 = vmatprep.subr.mxu0 0.0
  %478 = vmatpush1.msra.mxu0 %v449
  %479 = vmatprep.subr.mxu0 0.0
  %480 = vmatpush1.msra.mxu0 0.0
  %481 = vmatprep.subr.mxu0 0.0
  %482 = vmatpush1.msra.mxu0 0.0
  %483 = vmatprep.subr.mxu0 0.0
  %484 = vmatpush1.msra.mxu0 0.0
  %485 = vmatprep.subr.mxu0 0.0
  %486 = vmatpush1.msra.mxu0 0.0
  %487 = vmatprep.subr.mxu0 0.0
  %488 = vmatpush1.msra.mxu0 0.0
  %489 = vmatprep.subr.mxu0 0.0
  %490 = vmatpush1.msra.mxu0 0.0
  %491 = vmatprep.subr.mxu0 0.0
  %492 = vmatpush1.msra.mxu0 0.0
  %493 = vmatprep.subr.mxu0 0.0
  %494 = vmatpush1.msra.mxu0 0.0
  %495 = vmatprep.subr.mxu0 0.0
  %496 = vmatpush1.msra.mxu0 0.0
  %497 = vmatprep.subr.mxu0 0.0
  %498 = vmatpush1.msra.mxu0 0.0
  %499 = vmatprep.subr.mxu0 0.0
  %500 = vmatpush1.msra.mxu0 0.0
  %501 = vmatprep.subr.mxu0 0.0
  %502 = vmatpush1.msra.mxu0 0.0
  %503 = vmatprep.subr.mxu0 0.0
  %504 = vmatpush1.msra.mxu0 0.0
  %505 = vmatprep.subr.mxu0 0.0
  %506 = vmatpush1.msra.mxu0 0.0
  %507 = vmatprep.subr.mxu0 0.0
  %508 = vmatpush1.msra.mxu0 0.0
  %509 = vmatprep.subr.mxu0 0.0
  %510 = vmatpush1.msra.mxu0 0.0
  %511 = vmatprep.subr.mxu0 0.0
  %512 = vmatpush1.msra.mxu0 0.0
  %513 = vmatprep.subr.mxu0 0.0
  %514 = vmatpush1.msra.mxu0 0.0
  %515 = vmatprep.subr.mxu0 0.0
  %516 = vmatpush1.msra.mxu0 0.0
  %517 = vmatprep.subr.mxu0 0.0
  %518 = vmatpush1.msra.mxu0 0.0
  %519 = vmatprep.subr.mxu0 0.0
  %520 = vmatpush1.msra.mxu0 0.0
  %521 = vmatprep.subr.mxu0 0.0
  %522 = vmatpush1.msra.mxu0 0.0
  %523 = vmatprep.subr.mxu0 0.0
  %524 = vmatpush1.msra.mxu0 0.0
  %525 = vmatprep.subr.mxu0 0.0
  %526 = vmatpush1.msra.mxu0 0.0
  %527 = vmatprep.subr.mxu0 0.0
  %528 = vmatpush1.msra.mxu0 0.0
  %529 = vmatprep.subr.mxu0 0.0
  %530 = vmatpush1.msra.mxu0 0.0
  %531 = vmatprep.mubr.f32.mxu0 0.0
  %532 = vmatmul.mubr.f32.gmra.mrb[0].mxu0 %v459
  %v533 = vpop.f32.mrb[0].mxu0
  %v534 = vadd.f32 %v455, %v533
  %v535 = vpop.f32.mrb[0].mxu0
  %536 = vmatprep.mubr.f32.mxu0 0.0
  %537 = vmatmul.mubr.f32.gmra.mrb[0].mxu0 %v462
  %v538 = vpop.f32.mrb[0].mxu0
  %v539 = vadd.f32 %v455, %v538
  %v540 = vpop.f32.mrb[0].mxu0
  %541 = vmatprep.mubr.f32.mxu0 0.0
  %542 = vmatmul.mubr.f32.gmra.mrb[0].mxu0 %v465
  %v543 = vpop.f32.mrb[0].mxu0
  %v544 = vadd.f32 %v455, %v543
  %v545 = vpop.f32.mrb[0].mxu0
  %546 = vdwg.mxu0
  %v547 = vxor.u32 %v534, 2147483648
  %v548 = vxor.u32 %v539, 2147483648
  %v549 = vxor.u32 %v544, 2147483648
  %v550 = vmul.f32 %v547, 1.442695
  %v551 = vpow.pop %v550
  %v552 = vmul.f32 %v548, 1.442695
  %v553 = vpow.pop %v552
  %v554 = vmul.f32 %v549, 1.442695
  %v555 = vpow.pop %v554
  %v556 = vadd.f32 %v551, 1.0
  %v557 = vadd.f32 %v553, 1.0
  %v558 = vadd.f32 %v555, 1.0
  %v559 = vrcp.pop %v556
  %v560 = vmul.f32 1.0, %v559
  %v561 = vrcp.pop %v557
  %v562 = vmul.f32 1.0, %v561
  %v563 = vrcp.pop %v558
  %v564 = vmul.f32 1.0, %v563
  %566 = vset.pattern.permute.xlu0 64
  %567 = vperm.xlu0 %566, %v560
  %v568 = vpop.permute.xlu0 %567
  %571 = vset.pattern.permute.xlu0 64
  %572 = vperm.xlu0 %571, %v562
  %v573 = vpop.permute.xlu0 %572
  %576 = vset.pattern.permute.xlu0 64
  %577 = vperm.xlu0 %576, %v564
  %v578 = vpop.permute.xlu0 %577
  %v580 = vmul.f32 %v534, %v568
  %v581 = vmul.f32 %v539, %v573
  %v582 = vmul.f32 %v544, %v578
  %v583 = vld [vmem:[%s11] sm:$0xff]
  %v584 = vld [vmem:[%s11 + $0x8] sm:$0xff]
  %v585 = vld [vmem:[%s11 + $0x10] sm:$0xff]
  %v586 = vld [vmem:[%s11 + $0x18] sm:$0xff]
  %v587 = vld [vmem:[%s11 + $0x20] sm:$0xff]
  %v588 = vld [vmem:[%s11 + $0x28] sm:$0xff]
  %v589 = vld [vmem:[%s11 + $0x30] sm:$0xff]
  %v590 = vld [vmem:[%s11 + $0x38] sm:$0xff]
  %v591 = vld [vmem:[%s12] sm:$0x1]
  %v593 = vlaneseq
  %v594 = vshrl.u32 %v593, 7
  %v595 = vsub.s32 0, %v594
  %v596 = vrot.slane %v591, %v595
  %vm598 = vcmask 523264
  %v600 = vsel %vm598, %v580, 0
  %v603 = vsel %vm598, %v581, 0
  %v606 = vsel %vm598, %v582, 0
  %608 = vmatprep.subr.mxu0 0.0
  %609 = vmatpush1.msra.mxu0 %v583
  %610 = vmatprep.subr.mxu0 0.0
  %611 = vmatpush1.msra.mxu0 %v584
  %612 = vmatprep.subr.mxu0 0.0
  %613 = vmatpush1.msra.mxu0 %v585
  %614 = vmatprep.subr.mxu0 0.0
  %615 = vmatpush1.msra.mxu0 %v586
  %616 = vmatprep.subr.mxu0 0.0
  %617 = vmatpush1.msra.mxu0 %v587
  %618 = vmatprep.subr.mxu0 0.0
  %619 = vmatpush1.msra.mxu0 %v588
  %620 = vmatprep.subr.mxu0 0.0
  %621 = vmatpush1.msra.mxu0 %v589
  %622 = vmatprep.subr.mxu0 0.0
  %623 = vmatpush1.msra.mxu0 %v590
  %624 = vmatprep.subr.mxu0 0.0
  %625 = vmatpush1.msra.mxu0 0.0
  %626 = vmatprep.subr.mxu0 0.0
  %627 = vmatpush1.msra.mxu0 0.0
  %628 = vmatprep.subr.mxu0 0.0
  %629 = vmatpush1.msra.mxu0 0.0
  %630 = vmatprep.subr.mxu0 0.0
  %631 = vmatpush1.msra.mxu0 0.0
  %632 = vmatprep.subr.mxu0 0.0
  %633 = vmatpush1.msra.mxu0 0.0
  %634 = vmatprep.subr.mxu0 0.0
  %635 = vmatpush1.msra.mxu0 0.0
  %636 = vmatprep.subr.mxu0 0.0
  %637 = vmatpush1.msra.mxu0 0.0
  %638 = vmatprep.subr.mxu0 0.0
  %639 = vmatpush1.msra.mxu0 0.0
  %640 = vmatprep.subr.mxu0 0.0
  %641 = vmatpush1.msra.mxu0 0.0
  %642 = vmatprep.subr.mxu0 0.0
  %643 = vmatpush1.msra.mxu0 0.0
  %644 = vmatprep.subr.mxu0 0.0
  %645 = vmatpush1.msra.mxu0 0.0
  %646 = vmatprep.subr.mxu0 0.0
  %647 = vmatpush1.msra.mxu0 0.0
  %648 = vmatprep.subr.mxu0 0.0
  %649 = vmatpush1.msra.mxu0 0.0
  %650 = vmatprep.subr.mxu0 0.0
  %651 = vmatpush1.msra.mxu0 0.0
  %652 = vmatprep.subr.mxu0 0.0
  %653 = vmatpush1.msra.mxu0 0.0
  %654 = vmatprep.subr.mxu0 0.0
  %655 = vmatpush1.msra.mxu0 0.0
  %656 = vmatprep.subr.mxu0 0.0
  %657 = vmatpush1.msra.mxu0 0.0
  %658 = vmatprep.subr.mxu0 0.0
  %659 = vmatpush1.msra.mxu0 0.0
  %660 = vmatprep.subr.mxu0 0.0
  %661 = vmatpush1.msra.mxu0 0.0
  %662 = vmatprep.subr.mxu0 0.0
  %663 = vmatpush1.msra.mxu0 0.0
  %664 = vmatprep.subr.mxu0 0.0
  %665 = vmatpush1.msra.mxu0 0.0
  %666 = vmatprep.subr.mxu0 0.0
  %667 = vmatpush1.msra.mxu0 0.0
  %668 = vmatprep.subr.mxu0 0.0
  %669 = vmatpush1.msra.mxu0 0.0
  %670 = vmatprep.subr.mxu0 0.0
  %671 = vmatpush1.msra.mxu0 0.0
  %672 = vmatprep.mubr.f32.mxu0 0.0
  %673 = vmatmul.mubr.f32.gmra.mrb[0].mxu0 %v600
  %v674 = vpop.f32.mrb[0].mxu0
  %v675 = vadd.f32 %v596, %v674
  %v676 = vpop.f32.mrb[0].mxu0
  %677 = vmatprep.mubr.f32.mxu0 0.0
  %678 = vmatmul.mubr.f32.gmra.mrb[0].mxu0 %v603
  %v679 = vpop.f32.mrb[0].mxu0
  %v680 = vadd.f32 %v596, %v679
  %v681 = vpop.f32.mrb[0].mxu0
  %682 = vmatprep.mubr.f32.mxu0 0.0
  %683 = vmatmul.mubr.f32.gmra.mrb[0].mxu0 %v606
  %v684 = vpop.f32.mrb[0].mxu0
  %v685 = vadd.f32 %v596, %v684
  %v686 = vpop.f32.mrb[0].mxu0
  %687 = vdwg.mxu0
  %vm688 = vcmask 130048
  %689 = vst.msk [vmem:[%s13] sm:$0xff] %vm688, %v675
  %690 = vst.msk [vmem:[%s13 + $0x8] sm:$0xff] %vm688, %v680
  %691 = vst.msk [vmem:[%s13 + $0x10] sm:$0xff] %vm688, %v685
  // Predicated region
  $region54: #{tpu_custom_call.1} parent=0 // pred_check
    _
  $region55: #{tpu_custom_call.1} parent=0 // pred_check_branch
    %693 = sbr.rel (0) target = $region57
  $region56: #{tpu_custom_call.1} parent=0 // pred_region
    _
  $region57: #{tpu_custom_call.1} parent=0 // pred_fallthru
    _
  // Predicated region
  $region58: #{tpu_custom_call.1} parent=0 // pred_check
    _
  $region59: #{tpu_custom_call.1} parent=0 // pred_check_branch
    %695 = sbr.rel (0) target = $region61
  $region60: #{tpu_custom_call.1} parent=0 // pred_region
    _
  $region61: #{tpu_custom_call.1} parent=0 // pred_fallthru
    _

</llo_original>
